<compile_context>
chip_gen: v7x
topology: tpu7x:2x2x1
jax: 0.10.0
libtpu: 0.0.40
codegen_flags: <defaults>
</compile_context>

<pallas_src>
from functools import partial

import jax
import jax.numpy as jnp
from jax.experimental import pallas as pl
from jax.experimental.pallas import tpu as pltpu  # noqa: F401  (TPU backend)


def _rnn_cell_kernel(x_ref, h_ref, w_in_ref, w_hid_ref, b_ref, slab_ref):
    """Fused recurrent cell: one lane-dense output slab = [i2h | i2o | pad]."""
    # Two small K-split matmuls replace the wrapper-side concat; both heads
    # (and the lane padding) come out of a single fused (F, 128) weight, so
    # there is exactly one output slab write (unmasked full-lane vst).
    acc = jnp.dot(x_ref[...], w_in_ref[...],
                  preferred_element_type=jnp.float32)
    acc += jnp.dot(h_ref[...], w_hid_ref[...],
                   preferred_element_type=jnp.float32)
    acc += b_ref[...]                       # bias add on the f32 accumulator
    slab_ref[...] = acc.astype(slab_ref.dtype)


def prepare_params(w_i2h, b_i2h, w_i2o, b_i2o, input_size):
    """One-time param prep: fuse heads, transpose, lane-pad, split by input row.

    w_i2h: (hidden_size, input_size + hidden_size)   PyTorch layout
    w_i2o: (output_size, input_size + output_size)   PyTorch layout
    Returns (w_in (I, 128k), w_hid (Hin, 128k), b_fused (1, 128k)).
    """
    H, F = w_i2h.shape
    O = w_i2o.shape[0]
    # i2o fan-in must match the concatenated feature size, which requires
    # hidden_size == output_size (as in the PyTorch module's forward()).
    assert w_i2o.shape[1] == F, (
        "i2o fan-in must equal input_size + hidden_size "
        "(requires hidden_size == output_size)")
    assert input_size < F

    # Fuse both heads along the output axis, transpose once to (F, H+O).
    w_fused = jnp.concatenate([w_i2h, w_i2o], axis=0).T        # (F, H+O)
    b_fused = jnp.concatenate([b_i2h, b_i2o], axis=0)          # (H+O,)

    # Pad output lanes to a multiple of 128 so the kernel's store is unmasked.
    n_out = H + O
    n_pad = ((n_out + 127) // 128) * 128
    if n_pad != n_out:
        w_fused = jnp.pad(w_fused, ((0, 0), (0, n_pad - n_out)))
        b_fused = jnp.pad(b_fused, (0, n_pad - n_out))

    # Split by input rows so the kernel never needs a concatenated activation.
    w_in = w_fused[:input_size]                                # (I,   n_pad)
    w_hid = w_fused[input_size:]                               # (Hin, n_pad)
    return w_in, w_hid, b_fused.reshape(1, n_pad)


@partial(jax.jit, static_argnames=("hidden_size", "output_size"))
def recurrent_placeholder_net(inp, hidden, w_in, w_hid, b_fused,
                              *, hidden_size, output_size):
    """One recurrent step. Returns (output, new_hidden) like the PyTorch forward."""
    B, I = inp.shape
    _, Hin = hidden.shape
    n_pad = b_fused.shape[1]

    full = lambda shape: pl.BlockSpec(shape, lambda: tuple(0 for _ in shape))

    slab = pl.pallas_call(
        _rnn_cell_kernel,
        out_shape=jax.ShapeDtypeStruct((B, n_pad), inp.dtype),
        grid=(),
        in_specs=[
            full((B, I)),          # input
            full((B, Hin)),        # hidden
            full((I, n_pad)),      # fused weight rows for input
            full((Hin, n_pad)),    # fused weight rows for hidden
            full((1, n_pad)),      # fused bias
        ],
        out_specs=full((B, n_pad)),
    )(inp, hidden, w_in, w_hid, b_fused)

    new_hidden = slab[:, :hidden_size]
    output = slab[:, hidden_size:hidden_size + output_size]
    return output, new_hidden


def init_params(key, input_size, hidden_size, output_size):
    """Deterministic init mirroring nn.Linear's U(-1/sqrt(fan_in), 1/sqrt(fan_in))."""
    k1, k2, k3, k4 = jax.random.split(key, 4)
    fan_h = input_size + hidden_size
    fan_o = input_size + output_size
    bound_h = 1.0 / jnp.sqrt(fan_h)
    bound_o = 1.0 / jnp.sqrt(fan_o)
    w_i2h = jax.random.uniform(k1, (hidden_size, fan_h), jnp.float32,
                               -bound_h, bound_h)
    b_i2h = jax.random.uniform(k2, (hidden_size,), jnp.float32,
                               -bound_h, bound_h)
    w_i2o = jax.random.uniform(k3, (output_size, fan_o), jnp.float32,
                               -bound_o, bound_o)
    b_i2o = jax.random.uniform(k4, (output_size,), jnp.float32,
                               -bound_o, bound_o)
    return w_i2h, b_i2h, w_i2o, b_i2o


if __name__ == "__main__":
    # hidden_size == output_size is required by the i2o declaration (see note).
    input_size, hidden_size, output_size = 16, 32, 32
    batch = 2   # NOTE: raise toward a multiple of 8 (ideally 128) for real
                # throughput; B=2 matches the module's small-shape placeholder use.

    key = jax.random.PRNGKey(0)
    k_x, k_p = jax.random.split(key, 2)
    x = jax.random.normal(k_x, (batch, input_size), jnp.float32)
    h0 = jnp.zeros((batch, hidden_size), jnp.float32)   # mirrors initHidden()

    w_i2h, b_i2h, w_i2o, b_i2o = init_params(k_p, input_size, hidden_size,
                                             output_size)
    # One-time weight prep (hoisted off the per-step path).
    w_in, w_hid, b_fused = prepare_params(w_i2h, b_i2h, w_i2o, b_i2o, input_size)
    w_in, w_hid, b_fused = jax.block_until_ready((w_in, w_hid, b_fused))

    out, h1 = recurrent_placeholder_net(x, h0, w_in, w_hid, b_fused,
                                        hidden_size=hidden_size,
                                        output_size=output_size)
    out, h1 = jax.block_until_ready((out, h1))

    # Pure-JAX reference check of the original (unfused) math.
    combined = jnp.concatenate([x, h0], axis=1)
    ref_h = combined @ w_i2h.T + b_i2h
    ref_o = combined @ w_i2o.T + b_i2o
    assert out.shape == (batch, output_size)
    assert h1.shape == (batch, hidden_size)
    assert jnp.allclose(out, ref_o, atol=1e-5), "output mismatch"
    assert jnp.allclose(h1, ref_h, atol=1e-5), "hidden mismatch"

    print("KERNEL_OK")
</pallas_src>

<mosaic_0001>
module attributes {stable_mosaic.version = 11 : i64} {
  func.func @_rnn_cell_kernel(%arg0: memref<2x16xf32, #tpu.memory_space<vmem>>, %arg1: memref<2x32xf32, #tpu.memory_space<vmem>>, %arg2: memref<16x128xf32, #tpu.memory_space<vmem>>, %arg3: memref<32x128xf32, #tpu.memory_space<vmem>>, %arg4: memref<1x128xf32, #tpu.memory_space<vmem>>, %arg5: memref<2x128xf32, #tpu.memory_space<vmem>>) attributes {dimension_semantics = [], scalar_prefetch = 0 : i64, scratch_operands = 0 : i64, tpu.core_type = #tpu.core_type<tc>} {
    %c0 = arith.constant 0 : index
    %c0_0 = arith.constant 0 : index
    %0 = vector.load %arg0[%c0, %c0_0] : memref<2x16xf32, #tpu.memory_space<vmem>>, vector<2x16xf32>
    %c0_1 = arith.constant 0 : index
    %c0_2 = arith.constant 0 : index
    %1 = vector.load %arg2[%c0_1, %c0_2] : memref<16x128xf32, #tpu.memory_space<vmem>>, vector<16x128xf32>
    %cst = arith.constant dense<0.000000e+00> : vector<2x128xf32>
    %2 = tpu.matmul %0, %1, %cst {dimension_numbers = #tpu.dot_dimension_numbers<[1], [0], [0], [1], [0, 0, 1, 1], [], []>} : vector<2x16xf32>, vector<16x128xf32>, vector<2x128xf32> -> vector<2x128xf32>
    %c0_3 = arith.constant 0 : index
    %c0_4 = arith.constant 0 : index
    %3 = vector.load %arg1[%c0_3, %c0_4] : memref<2x32xf32, #tpu.memory_space<vmem>>, vector<2x32xf32>
    %c0_5 = arith.constant 0 : index
    %c0_6 = arith.constant 0 : index
    %4 = vector.load %arg3[%c0_5, %c0_6] : memref<32x128xf32, #tpu.memory_space<vmem>>, vector<32x128xf32>
    %cst_7 = arith.constant dense<0.000000e+00> : vector<2x128xf32>
    %5 = tpu.matmul %3, %4, %cst_7 {dimension_numbers = #tpu.dot_dimension_numbers<[1], [0], [0], [1], [0, 0, 1, 1], [], []>} : vector<2x32xf32>, vector<32x128xf32>, vector<2x128xf32> -> vector<2x128xf32>
    %6 = arith.addf %2, %5 : vector<2x128xf32>
    %c0_8 = arith.constant 0 : index
    %c0_9 = arith.constant 0 : index
    %7 = vector.load %arg4[%c0_8, %c0_9] : memref<1x128xf32, #tpu.memory_space<vmem>>, vector<1x128xf32>
    %8 = vector.broadcast %7 : vector<1x128xf32> to vector<2x128xf32>
    %9 = arith.addf %6, %8 : vector<2x128xf32>
    %c0_10 = arith.constant 0 : index
    %c0_11 = arith.constant 0 : index
    %10 = vector.load %arg5[%c0_10, %c0_11] : memref<2x128xf32, #tpu.memory_space<vmem>>, vector<2x128xf32>
    tpu.vector_store %arg5[%c0_10, %c0_11], %9 {strides = array<i32>} : memref<2x128xf32, #tpu.memory_space<vmem>>, vector<2x128xf32>,
    return
  }
}

</mosaic_0001>

<llo_original>
// kernel: recurrent_placeholder_net.1
$region0: #{recurrent_placeholder_net.1}
  #allocation0 [shape = 'u32[]', space=smem, size = 0x4, offset = 0x4, fixed_abs, tag = 'smem constant byte address 0x4 - core index']
  #allocation1 [shape = 'u32[144,128]{1,0:T(1,128)}', space=vmem, size = 0x12000, scoped, tag = 'internal scratch']
  %s0 = inlined_call_operand.hbm [shape: f32[2,16], index: 0, kind: input, shape index: {}]
  %s1 = inlined_call_operand.vmem [shape: f32[2,32], index: 1, kind: input, shape index: {}]
  %s2 = inlined_call_operand.hbm [shape: f32[16,128], index: 2, kind: input, shape index: {}]
  %s3 = inlined_call_operand.hbm [shape: f32[32,128], index: 3, kind: input, shape index: {}]
  %s4 = inlined_call_operand.vmem [shape: f32[1,128], index: 4, kind: input, shape index: {}]
  %s5 = inlined_call_operand.vmem [shape: f32[2,128], index: 5, kind: output, shape index: {}]
  %s6 = sld [smem:[#allocation0]]
  $region42: #{recurrent_placeholder_net.1} parent=0
    _
  %s8 = ssub.s32 1, %s6
  %s9 = scalar_select 0, %s8, %s6
  $region1: #{recurrent_placeholder_net.1} parent=0
    #allocation2 [shape = 'u8[1024]{0}', space=vmem, size = 0x400, scoped, tag = 'input window, operand 0, single buffered']
    #allocation3 [shape = 's32[1]{0}', space=sflag, size = 0x4, scoped, tag = 'scoped memory for recurrent_placeholder_net.1']
    #allocation4 [shape = 'u8[8192]{0}', space=vmem, size = 0x2000, scoped, tag = 'input window, operand 2, single buffered']
    #allocation5 [shape = 's32[1]{0}', space=sflag, size = 0x4, scoped, tag = 'scoped memory for recurrent_placeholder_net.1']
    #allocation6 [shape = 'u8[16384]{0}', space=vmem, size = 0x4000, scoped, tag = 'input window, operand 3, single buffered']
    %10 = vsyncpa [#allocation3], 0
    %11 = vsyncpa [#allocation5], 0
    // Predicated region
    $region2: #{recurrent_placeholder_net.1} parent=1 // pred_check
      _
    $region3: #{recurrent_placeholder_net.1} parent=1 // pred_check_branch
      %13 = sbr.rel (0) target = $region5
    $region4: #{recurrent_placeholder_net.1} parent=1 // pred_region
      %s15 = ssub.s32 32, 32
      %16 = vsyncadd [#allocation3], %s15
      %s18 = sshll.u32 [#allocation2], 4
      %s19 = int_to_ptr.vmem [resolvable:$true] %s18
      %21 = dma.hbm_to_vmem [thread:$0]  %s0, 32, %s19, [#allocation3]
    $region5: #{recurrent_placeholder_net.1} parent=1 // pred_fallthru
      _
    // Predicated region
    $region6: #{recurrent_placeholder_net.1} parent=1 // pred_check
      _
    $region7: #{recurrent_placeholder_net.1} parent=1 // pred_check_branch
      %23 = sbr.rel (0) target = $region9
    $region8: #{recurrent_placeholder_net.1} parent=1 // pred_region
      _
    $region9: #{recurrent_placeholder_net.1} parent=1 // pred_fallthru
      _
    // Predicated region
    $region10: #{recurrent_placeholder_net.1} parent=1 // pred_check
      _
    $region11: #{recurrent_placeholder_net.1} parent=1 // pred_check_branch
      %25 = sbr.rel (0) target = $region13
    $region12: #{recurrent_placeholder_net.1} parent=1 // pred_region
      %s27 = ssub.s32 256, 256
      %28 = vsyncadd [#allocation5], %s27
      %s29 = sshll.u32 [#allocation4], 4
      %s30 = int_to_ptr.vmem [resolvable:$true] %s29
      %35 = dma.hbm_to_vmem [thread:$0]  %s2, 256, %s30, [#allocation5], 128, 128, 8
    $region13: #{recurrent_placeholder_net.1} parent=1 // pred_fallthru
      _
    // Predicated region
    $region14: #{recurrent_placeholder_net.1} parent=1 // pred_check
      _
    $region15: #{recurrent_placeholder_net.1} parent=1 // pred_check_branch
      %37 = sbr.rel (0) target = $region17
    $region16: #{recurrent_placeholder_net.1} parent=1 // pred_region
      %s39 = ssub.s32 512, 512
      %40 = vsyncadd [#allocation5], %s39
      %s41 = sshll.u32 [#allocation6], 4
      %s42 = int_to_ptr.vmem [resolvable:$true] %s41
      %47 = dma.hbm_to_vmem [thread:$0]  %s3, 512, %s42, [#allocation5], 128, 128, 8
    $region17: #{recurrent_placeholder_net.1} parent=1 // pred_fallthru
      _
    // Predicated region
    $region18: #{recurrent_placeholder_net.1} parent=1 // pred_check
      _
    $region19: #{recurrent_placeholder_net.1} parent=1 // pred_check_branch
      %49 = sbr.rel (0) target = $region21
    $region20: #{recurrent_placeholder_net.1} parent=1 // pred_region
      _
    $region21: #{recurrent_placeholder_net.1} parent=1 // pred_fallthru
      _
    // Predicated region
    $region22: #{recurrent_placeholder_net.1} parent=1 // pred_check
      _
    $region23: #{recurrent_placeholder_net.1} parent=1 // pred_check_branch
      %51 = sbr.rel (0) target = $region25
    $region24: #{recurrent_placeholder_net.1} parent=1 // pred_region
      %52 = dma.done [#allocation3], 32
    $region25: #{recurrent_placeholder_net.1} parent=1 // pred_fallthru
      _
    // Predicated region
    $region26: #{recurrent_placeholder_net.1} parent=1 // pred_check
      _
    $region27: #{recurrent_placeholder_net.1} parent=1 // pred_check_branch
      %54 = sbr.rel (0) target = $region29
    $region28: #{recurrent_placeholder_net.1} parent=1 // pred_region
      %55 = dma.done [#allocation5], 256
    $region29: #{recurrent_placeholder_net.1} parent=1 // pred_fallthru
      _
    // Predicated region
    $region30: #{recurrent_placeholder_net.1} parent=1 // pred_check
      _
    $region31: #{recurrent_placeholder_net.1} parent=1 // pred_check_branch
      %57 = sbr.rel (0) target = $region33
    $region32: #{recurrent_placeholder_net.1} parent=1 // pred_region
      %58 = dma.done [#allocation5], 512
    $region33: #{recurrent_placeholder_net.1} parent=1 // pred_fallthru
      _
    %v59 = vld [vmem:[#allocation2] sm:$0x3]
    %v60 = vld [vmem:[#allocation4] sm:$0xff]
    %v61 = vld [vmem:[#allocation4 + $0x8] sm:$0xff]
    %v62 = vld [vmem:[%s1] sm:$0x3]
    %v63 = vld [vmem:[#allocation6] sm:$0xff]
    %v64 = vld [vmem:[#allocation6 + $0x8] sm:$0xff]
    %v65 = vld [vmem:[#allocation6 + $0x10] sm:$0xff]
    %v66 = vld [vmem:[#allocation6 + $0x18] sm:$0xff]
    %vm67 = vcmask 261120
    %v69 = vsel %vm67, %v62, 0
    %71 = vmatprep.subr.mxu0 0.0
    %72 = vmatpush1.msra.mxu0 %v63
    %73 = vmatprep.subr.mxu0 0.0
    %74 = vmatpush1.msra.mxu0 %v64
    %75 = vmatprep.subr.mxu0 0.0
    %76 = vmatpush1.msra.mxu0 %v65
    %77 = vmatprep.subr.mxu0 0.0
    %78 = vmatpush1.msra.mxu0 %v66
    %79 = vmatprep.subr.mxu0 0.0
    %80 = vmatpush1.msra.mxu0 0.0
    %81 = vmatprep.subr.mxu0 0.0
    %82 = vmatpush1.msra.mxu0 0.0
    %83 = vmatprep.subr.mxu0 0.0
    %84 = vmatpush1.msra.mxu0 0.0
    %85 = vmatprep.subr.mxu0 0.0
    %86 = vmatpush1.msra.mxu0 0.0
    %87 = vmatprep.subr.mxu0 0.0
    %88 = vmatpush1.msra.mxu0 0.0
    %89 = vmatprep.subr.mxu0 0.0
    %90 = vmatpush1.msra.mxu0 0.0
    %91 = vmatprep.subr.mxu0 0.0
    %92 = vmatpush1.msra.mxu0 0.0
    %93 = vmatprep.subr.mxu0 0.0
    %94 = vmatpush1.msra.mxu0 0.0
    %95 = vmatprep.subr.mxu0 0.0
    %96 = vmatpush1.msra.mxu0 0.0
    %97 = vmatprep.subr.mxu0 0.0
    %98 = vmatpush1.msra.mxu0 0.0
    %99 = vmatprep.subr.mxu0 0.0
    %100 = vmatpush1.msra.mxu0 0.0
    %101 = vmatprep.subr.mxu0 0.0
    %102 = vmatpush1.msra.mxu0 0.0
    %103 = vmatprep.subr.mxu0 0.0
    %104 = vmatpush1.msra.mxu0 0.0
    %105 = vmatprep.subr.mxu0 0.0
    %106 = vmatpush1.msra.mxu0 0.0
    %107 = vmatprep.subr.mxu0 0.0
    %108 = vmatpush1.msra.mxu0 0.0
    %109 = vmatprep.subr.mxu0 0.0
    %110 = vmatpush1.msra.mxu0 0.0
    %111 = vmatprep.subr.mxu0 0.0
    %112 = vmatpush1.msra.mxu0 0.0
    %113 = vmatprep.subr.mxu0 0.0
    %114 = vmatpush1.msra.mxu0 0.0
    %115 = vmatprep.subr.mxu0 0.0
    %116 = vmatpush1.msra.mxu0 0.0
    %117 = vmatprep.subr.mxu0 0.0
    %118 = vmatpush1.msra.mxu0 0.0
    %119 = vmatprep.subr.mxu0 0.0
    %120 = vmatpush1.msra.mxu0 0.0
    %121 = vmatprep.subr.mxu0 0.0
    %122 = vmatpush1.msra.mxu0 0.0
    %123 = vmatprep.subr.mxu0 0.0
    %124 = vmatpush1.msra.mxu0 0.0
    %125 = vmatprep.subr.mxu0 0.0
    %126 = vmatpush1.msra.mxu0 0.0
    %127 = vmatprep.subr.mxu0 0.0
    %128 = vmatpush1.msra.mxu0 0.0
    %129 = vmatprep.subr.mxu0 0.0
    %130 = vmatpush1.msra.mxu0 0.0
    %131 = vmatprep.subr.mxu0 0.0
    %132 = vmatpush1.msra.mxu0 0.0
    %133 = vmatprep.subr.mxu0 0.0
    %134 = vmatpush1.msra.mxu0 0.0
    %135 = vmatprep.mubr.f32.mxu0 0.0
    %136 = vmatmul.mubr.f32.gmra.mrb[0].mxu0 %v69
    %v137 = vpop.f32.mrb[0].mxu0
    %v138 = vadd.f32 0.0, %v137
    %v139 = vpop.f32.mrb[0].mxu0
    %140 = vdwg.mxu0
    %vm141 = vcmask 130048
    %v143 = vsel %vm141, %v59, 0
    %145 = vmatprep.subr.mxu0 0.0
    %146 = vmatpush1.msra.mxu0 %v60
    %147 = vmatprep.subr.mxu0 0.0
    %148 = vmatpush1.msra.mxu0 %v61
    %149 = vmatprep.subr.mxu0 0.0
    %150 = vmatpush1.msra.mxu0 0.0
    %151 = vmatprep.subr.mxu0 0.0
    %152 = vmatpush1.msra.mxu0 0.0
    %153 = vmatprep.subr.mxu0 0.0
    %154 = vmatpush1.msra.mxu0 0.0
    %155 = vmatprep.subr.mxu0 0.0
    %156 = vmatpush1.msra.mxu0 0.0
    %157 = vmatprep.subr.mxu0 0.0
    %158 = vmatpush1.msra.mxu0 0.0
    %159 = vmatprep.subr.mxu0 0.0
    %160 = vmatpush1.msra.mxu0 0.0
    %161 = vmatprep.subr.mxu0 0.0
    %162 = vmatpush1.msra.mxu0 0.0
    %163 = vmatprep.subr.mxu0 0.0
    %164 = vmatpush1.msra.mxu0 0.0
    %165 = vmatprep.subr.mxu0 0.0
    %166 = vmatpush1.msra.mxu0 0.0
    %167 = vmatprep.subr.mxu0 0.0
    %168 = vmatpush1.msra.mxu0 0.0
    %169 = vmatprep.subr.mxu0 0.0
    %170 = vmatpush1.msra.mxu0 0.0
    %171 = vmatprep.subr.mxu0 0.0
    %172 = vmatpush1.msra.mxu0 0.0
    %173 = vmatprep.subr.mxu0 0.0
    %174 = vmatpush1.msra.mxu0 0.0
    %175 = vmatprep.subr.mxu0 0.0
    %176 = vmatpush1.msra.mxu0 0.0
    %177 = vmatprep.subr.mxu0 0.0
    %178 = vmatpush1.msra.mxu0 0.0
    %179 = vmatprep.subr.mxu0 0.0
    %180 = vmatpush1.msra.mxu0 0.0
    %181 = vmatprep.subr.mxu0 0.0
    %182 = vmatpush1.msra.mxu0 0.0
    %183 = vmatprep.subr.mxu0 0.0
    %184 = vmatpush1.msra.mxu0 0.0
    %185 = vmatprep.subr.mxu0 0.0
    %186 = vmatpush1.msra.mxu0 0.0
    %187 = vmatprep.subr.mxu0 0.0
    %188 = vmatpush1.msra.mxu0 0.0
    %189 = vmatprep.subr.mxu0 0.0
    %190 = vmatpush1.msra.mxu0 0.0
    %191 = vmatprep.subr.mxu0 0.0
    %192 = vmatpush1.msra.mxu0 0.0
    %193 = vmatprep.subr.mxu0 0.0
    %194 = vmatpush1.msra.mxu0 0.0
    %195 = vmatprep.subr.mxu0 0.0
    %196 = vmatpush1.msra.mxu0 0.0
    %197 = vmatprep.subr.mxu0 0.0
    %198 = vmatpush1.msra.mxu0 0.0
    %199 = vmatprep.subr.mxu0 0.0
    %200 = vmatpush1.msra.mxu0 0.0
    %201 = vmatprep.subr.mxu0 0.0
    %202 = vmatpush1.msra.mxu0 0.0
    %203 = vmatprep.subr.mxu0 0.0
    %204 = vmatpush1.msra.mxu0 0.0
    %205 = vmatprep.subr.mxu0 0.0
    %206 = vmatpush1.msra.mxu0 0.0
    %207 = vmatprep.subr.mxu0 0.0
    %208 = vmatpush1.msra.mxu0 0.0
    %209 = vmatprep.mubr.f32.mxu0 0.0
    %210 = vmatmul.mubr.f32.gmra.mrb[0].mxu0 %v143
    %v211 = vpop.f32.mrb[0].mxu0
    %v212 = vadd.f32 %v138, %v211
    %v213 = vpop.f32.mrb[0].mxu0
    %214 = vdwg.mxu0
    %v215 = vld [vmem:[%s4] sm:$0x1]
    %v217 = vlaneseq
    %v218 = vshrl.u32 %v217, 7
    %v219 = vsub.s32 0, %v218
    %v220 = vrot.slane %v215, %v219
    %v222 = vadd.f32 %v212, %v220
    %223 = vst [vmem:[%s5] sm:$0x3] %v222
    // Predicated region
    $region34: #{recurrent_placeholder_net.1} parent=1 // pred_check
      _
    $region35: #{recurrent_placeholder_net.1} parent=1 // pred_check_branch
      %225 = sbr.rel (0) target = $region37
    $region36: #{recurrent_placeholder_net.1} parent=1 // pred_region
      _
    $region37: #{recurrent_placeholder_net.1} parent=1 // pred_fallthru
      _
    // Predicated region
    $region38: #{recurrent_placeholder_net.1} parent=1 // pred_check
      _
    $region39: #{recurrent_placeholder_net.1} parent=1 // pred_check_branch
      %227 = sbr.rel (0) target = $region41
    $region40: #{recurrent_placeholder_net.1} parent=1 // pred_region
      _
    $region41: #{recurrent_placeholder_net.1} parent=1 // pred_fallthru
      _
    %228 = vsyncpa [#allocation3], 1
    %229 = vsyncpa [#allocation5], 1

</llo_original>
